<compile_context>
chip_gen: v7x
topology: tpu7x:2x2x1
jax: 0.10.0
libtpu: 0.0.40
codegen_flags: <defaults>
</compile_context>

<pallas_src>
import functools

import jax
import jax.numpy as jnp
from jax.experimental import pallas as pl
from jax.experimental.pallas import tpu as pltpu


def _dequant_kernel(offset, x_ref, w_ref, o_ref):
    # x_ref: (TM, TN*B) f32 bits  -> cast to bf16 in-register (exact for 0/1)
    # w_ref: (TN*B, TN) bf16 diagonal band with the 1/2**B scale folded in
    # o_ref: (TM, TN)  f32
    x = x_ref[...].astype(jnp.bfloat16)
    num = jnp.dot(x, w_ref[...], preferred_element_type=jnp.float32)
    o_ref[...] = num + offset


def _round_up(x, m):
    return ((x + m - 1) // m) * m


def dequantization_layer(x, B, *, tile_m=1024, tile_n=256):
    """x: [batch, N*B] tensor of 0/1 bits (any float dtype). Returns [batch, N] float32.

    Tuning notes: keep tile_n <= 256 everywhere (128 on v5e); raise tile_m
    (>= 2048 on v7x) when enlarging tiles -- this kernel is HBM-bandwidth bound.
    """
    batch, nb = x.shape
    assert nb % B == 0, "feature dim must be a multiple of B"
    n = nb // B

    # Tile selection: sublane-aligned batch tile, lane-aligned (mult of 128)
    # value tile. Ragged shapes are padded up to the tile grid (zeros decode to
    # harmless values in the padded region, which is sliced off).
    tile_m = max(8, _round_up(tile_m, 8))
    tile_n = max(128, _round_up(tile_n, 128))
    tm = min(tile_m, _round_up(batch, 8))
    tn = min(tile_n, _round_up(n, 128))
    batch_p = _round_up(batch, tm)
    n_p = _round_up(n, tn)

    if batch_p != batch or n_p != n:
        x = jnp.pad(x, ((0, batch_p - batch), (0, (n_p - n) * B)))

    # Shared diagonal band of the block-diagonal dequant matrix with the 1/2**B
    # scale folded in:  W_band[j*B + i, j] = 2**(-1 - i)   (exact powers of two,
    # exact in bf16).
    w_vec = jnp.array([2.0 ** (-1 - i) for i in range(B)], dtype=jnp.float32)
    w_band = jnp.kron(jnp.eye(tn, dtype=jnp.float32), w_vec.reshape(B, 1))
    w_band = w_band.astype(jnp.bfloat16)          # (tn*B, tn), shared by every N tile

    offset = 0.5 / float(2 ** B)
    kernel = functools.partial(_dequant_kernel, offset)

    grid = (n_p // tn, batch_p // tm)             # N tiles outer, batch tiles inner

    # VMEM budget from the actual tile working set (double-buffered x/out/W),
    # with headroom; capped at 64 MiB (v7x physical VMEM).
    x_bytes = 2 * tm * tn * B * jnp.dtype(x.dtype).itemsize
    o_bytes = 2 * tm * tn * 4
    w_bytes = 2 * tn * B * tn * 2
    need = x_bytes + o_bytes + w_bytes
    vmem_limit = max(32 << 20, min(int(need * 1.25) + (2 << 20), 64 << 20))

    out = pl.pallas_call(
        kernel,
        out_shape=jax.ShapeDtypeStruct((batch_p, n_p), jnp.float32),
        grid_spec=pltpu.PrefetchScalarGridSpec(
            num_scalar_prefetch=0,
            grid=grid,
            in_specs=[
                pl.BlockSpec((tm, tn * B), lambda j, i: (i, j)),  # x tile
                pl.BlockSpec((tn * B, tn), lambda j, i: (0, 0)),  # shared W band
            ],
            out_specs=pl.BlockSpec((tm, tn), lambda j, i: (i, j)),
        ),
        compiler_params=pltpu.CompilerParams(
            dimension_semantics=("parallel", "parallel"),
            vmem_limit_bytes=vmem_limit,
        ),
    )(x, w_band)

    if batch_p != batch or n_p != n:
        out = out[:batch, :n]
    return out


def _reference(x, B):
    x = x.astype(jnp.float32)
    batch, nb = x.shape
    n = nb // B
    bits = x.reshape(batch, n, B)
    weights = jnp.array([2.0 ** (B - 1 - i) for i in range(B)], dtype=jnp.float32)
    num = jnp.sum(bits * weights[None, None, :], axis=-1)
    return (num + 0.5) / (2 ** B)


if __name__ == "__main__":
    key = jax.random.PRNGKey(0)

    # --- Test 1: tile-aligned shapes, small explicit tiles so the 2D grid is
    # genuinely exercised (grid = (2, 2)); defaults handle large shapes. ---
    B = 4
    batch, n = 64, 256
    k1, k2 = jax.random.split(key)
    x_bits = jax.random.bernoulli(k1, p=0.5, shape=(batch, n * B)).astype(jnp.float32)

    out = dequantization_layer(x_bits, B, tile_m=32, tile_n=128)
    out = jax.block_until_ready(out)
    ref = _reference(x_bits, B)
    assert out.shape == (batch, n), out.shape
    assert jnp.allclose(out, ref, atol=1e-6, rtol=1e-6), "mismatch vs reference (aligned)"

    # --- Test 2: ragged batch / N exercising the zero-pad + slice path. ---
    batch2, n2 = 52, 200
    x_bits2 = jax.random.bernoulli(k2, p=0.5, shape=(batch2, n2 * B)).astype(jnp.float32)
    out2 = dequantization_layer(x_bits2, B, tile_m=32, tile_n=128)
    out2 = jax.block_until_ready(out2)
    ref2 = _reference(x_bits2, B)
    assert out2.shape == (batch2, n2), out2.shape
    assert jnp.allclose(out2, ref2, atol=1e-6, rtol=1e-6), "mismatch vs reference (ragged)"

    print("KERNEL_OK")
</pallas_src>

<mosaic_0001>
module attributes {stable_mosaic.version = 11 : i64} {
  func.func @_dequant_kernel(%arg0: i32, %arg1: i32, %arg2: memref<32x512xf32, #tpu.memory_space<vmem>>, %arg3: memref<512x128xbf16, #tpu.memory_space<vmem>>, %arg4: memref<32x128xf32, #tpu.memory_space<vmem>>) attributes {dimension_semantics = [#tpu.dimension_semantics<parallel>, #tpu.dimension_semantics<parallel>], iteration_bounds = array<i64: 2, 2>, scalar_prefetch = 0 : i64, scratch_operands = 0 : i64, tpu.core_type = #tpu.core_type<tc>, window_params = [{transform_indices = @transform_0, window_bounds = array<i64: 32, 512>}, {pipeline_mode = #tpu.pipeline_mode<synchronous>, transform_indices = @transform_1, window_bounds = array<i64: 512, 128>}, {transform_indices = @transform_2, window_bounds = array<i64: 32, 128>}]} {
    %c0 = arith.constant 0 : index
    %c0_0 = arith.constant 0 : index
    %0 = vector.load %arg2[%c0, %c0_0] : memref<32x512xf32, #tpu.memory_space<vmem>>, vector<32x512xf32>
    %1 = arith.truncf %0 : vector<32x512xf32> to vector<32x512xbf16>
    %c0_1 = arith.constant 0 : index
    %c0_2 = arith.constant 0 : index
    %2 = vector.load %arg3[%c0_1, %c0_2] : memref<512x128xbf16, #tpu.memory_space<vmem>>, vector<512x128xbf16>
    %cst = arith.constant dense<0.000000e+00> : vector<32x128xf32>
    %3 = tpu.matmul %1, %2, %cst {dimension_numbers = #tpu.dot_dimension_numbers<[1], [0], [0], [1], [0, 0, 1, 1], [], []>} : vector<32x512xbf16>, vector<512x128xbf16>, vector<32x128xf32> -> vector<32x128xf32>
    %cst_3 = arith.constant 3.125000e-02 : f32
    %4 = vector.broadcast %cst_3 : f32 to vector<32x128xf32>
    %5 = arith.addf %3, %4 : vector<32x128xf32>
    %c0_4 = arith.constant 0 : index
    %c0_5 = arith.constant 0 : index
    %6 = vector.load %arg4[%c0_4, %c0_5] : memref<32x128xf32, #tpu.memory_space<vmem>>, vector<32x128xf32>
    tpu.vector_store %arg4[%c0_4, %c0_5], %5 {strides = array<i32>} : memref<32x128xf32, #tpu.memory_space<vmem>>, vector<32x128xf32>,
    return
  }
  func.func @transform_0(%arg0: i32, %arg1: i32) -> (i32, i32) {
    %c0_i32 = arith.constant 0 : i32
    return %arg1, %arg0 : i32, i32
  }
  func.func @transform_1(%arg0: i32, %arg1: i32) -> (i32, i32) {
    %c0_i32 = arith.constant 0 : i32
    %c0_i32_0 = arith.constant 0 : i32
    %c0_i32_1 = arith.constant 0 : i32
    return %c0_i32, %c0_i32_0 : i32, i32
  }
  func.func @transform_2(%arg0: i32, %arg1: i32) -> (i32, i32) {
    %c0_i32 = arith.constant 0 : i32
    return %arg1, %arg0 : i32, i32
  }
}

</mosaic_0001>

<llo_original>
// kernel: tpu_custom_call.1
$region0: #{tpu_custom_call.1}
  #allocation0 [shape = 'u32[]', space=smem, size = 0x4, offset = 0x4, fixed_abs, tag = 'smem constant byte address 0x4 - core index']
  #allocation1 [shape = 'u32[144,128]{1,0:T(1,128)}', space=vmem, size = 0x12000, scoped, tag = 'internal scratch']
  %s0 = inlined_call_operand.hbm [shape: f32[64,1024], index: 0, kind: input, shape index: {}]
  %s1 = inlined_call_operand.hbm [shape: bf16[512,128], index: 1, kind: input, shape index: {}]
  %s2 = inlined_call_operand.hbm [shape: f32[64,256], index: 2, kind: output, shape index: {}]
  %s3 = sld [smem:[#allocation0]]
  $region49: #{tpu_custom_call.1} parent=0
    _
  %s5 = ssub.s32 1, %s3
  %s6 = scalar_select 0, %s5, %s3
  $region1: #{tpu_custom_call.1} parent=0
    #allocation2 [shape = 'u8[131072]{0}', space=vmem, size = 0x20000, scoped, tag = 'input window, operand 0']
    #allocation3 [shape = 's32[2]{0}', space=sflag, size = 0x8, scoped, tag = 'scoped memory for tpu_custom_call.1']
    #allocation4 [shape = 's32[2]{0}', space=sflag, size = 0x8, scoped, tag = 'scoped memory for tpu_custom_call.1']
    #allocation5 [shape = 'u8[131072]{0}', space=vmem, size = 0x20000, scoped, tag = 'input window, operand 1, single buffered']
    #allocation6 [shape = 's32[1]{0}', space=sflag, size = 0x4, scoped, tag = 'scoped memory for tpu_custom_call.1']
    #allocation7 [shape = 'u8[32768]{0}', space=vmem, size = 0x8000, scoped, tag = 'output window, operand 0']
    %7 = vsyncpa [#allocation3], 0
    %s8 = scalar_lea.sflag [#allocation3], 1
    %9 = vsyncpa %s8, 0
    %10 = vsyncpa [#allocation6], 0
    %11 = vsyncpa [#allocation4], 0
    %s12 = scalar_lea.sflag [#allocation4], 1
    %13 = vsyncpa %s12, 0
    loop: start=0, step=1, limit=6
    $region2: #{tpu_custom_call.1} parent=1 // loop_pre_header
      _
    $region3: #{tpu_custom_call.1} parent=1 // loop_header
      %s15 = sphi 0, %s19
      %p16 = scmp.ge.s32.totalorder %s15, 6
      %s22 = sphi 0, %s34
      %s23 = sphi 0, %s30
      %s24 = sphi 0, %s22
      %s25 = sphi 0, %s23
      %s26 = sphi 0, %s24
      %s27 = sphi 0, %s25
      %s39 = sphi 0, %s41
      %s42 = sphi 0, %s39
      %s43 = sphi 0, %s42
      %s59 = sphi 0, %s43
      %s63 = sphi 0, %s63
      %s65 = sphi 0, %s63
      %s66 = sphi 0, %s65
      %s80 = sphi 0, %s66
      %s88 = sphi 0, %s90
      %s91 = sphi 0, %s88
      %s92 = sphi 0, %s91
      %s108 = sphi 0, %s92
    $region4: #{tpu_custom_call.1} parent=1 // loop_header_branch
      %18 = sbr.rel (%p16) target = $region8
    $region5: #{tpu_custom_call.1} parent=1 // loop_body
      %s20 = ssub.s32 %s15, 1
      %s21 = ssub.s32 %s15, 2
      %s28 = sadd.s32 1, %s23
      %p29 = scmp.ge.s32.totalorder %s28, 2
      %s30 = scalar_select %p29, 0, %s28
      %s31 = sadd.s32 1, %s22
      %s32 = scalar_select %p29, %s31, %s22
      %p33 = scmp.ge.s32.totalorder %s32, 2
      %s34 = scalar_select %p33, 0, %s32
      %s35 = ssub.s32 %s23, %s30
      %s36 = ssub.s32 %s22, %s34
      %s37 = sor.u32 %s35, %s36
      %p38 = scmp.eq.s32.totalorder %s37, 0
      %s40 = sadd.s32 %s39, 1
      %s41 = scalar_select %p38, %s39, %s40
      %p44 = pneg %p38
      %p45 = scmp.eq.s32.totalorder %s15, 3
      %p46 = por %p44, %p45
      %p47 = scmp.ne.s32.totalorder %s39, %s42
      %p48 = scmp.eq.s32.totalorder %s15, 0
      %p49 = por %p47, %p48
      %p50 = scmp.ne.s32.totalorder %s39, %s42
      %p51 = scmp.eq.s32.totalorder %s20, 3
      %p52 = por %p50, %p51
      %p53 = scmp.ne.s32.totalorder %s42, %s43
      %p54 = scmp.eq.s32.totalorder %s20, 0
      %p55 = por %p53, %p54
      %p56 = scmp.ne.s32.totalorder %s42, %s43
      %p57 = scmp.eq.s32.totalorder %s21, 3
      %p58 = por %p56, %p57
      %p60 = scmp.ne.s32.totalorder %s43, %s59
      %p61 = scmp.eq.s32.totalorder %s21, 0
      %p62 = por %p60, %p61
      %s64 = sadd.s32 %s63, 1
      %p67 = scmp.eq.s32.totalorder %s15, 3
      %p68 = scmp.ne.s32.totalorder %s63, %s65
      %p69 = scmp.eq.s32.totalorder %s15, 0
      %p70 = por %p68, %p69
      %p71 = scmp.ne.s32.totalorder %s63, %s65
      %p72 = scmp.eq.s32.totalorder %s20, 3
      %p73 = por %p71, %p72
      %p74 = scmp.ne.s32.totalorder %s65, %s66
      %p75 = scmp.eq.s32.totalorder %s20, 0
      %p76 = por %p74, %p75
      %p77 = scmp.ne.s32.totalorder %s65, %s66
      %p78 = scmp.eq.s32.totalorder %s21, 3
      %p79 = por %p77, %p78
      %p81 = scmp.ne.s32.totalorder %s66, %s80
      %p82 = scmp.eq.s32.totalorder %s21, 0
      %p83 = por %p81, %p82
      %s84 = ssub.s32 %s23, %s30
      %s85 = ssub.s32 %s22, %s34
      %s86 = sor.u32 %s84, %s85
      %p87 = scmp.eq.s32.totalorder %s86, 0
      %s89 = sadd.s32 %s88, 1
      %s90 = scalar_select %p87, %s88, %s89
      %p93 = pneg %p87
      %p94 = scmp.eq.s32.totalorder %s15, 3
      %p95 = por %p93, %p94
      %p96 = scmp.ne.s32.totalorder %s88, %s91
      %p97 = scmp.eq.s32.totalorder %s15, 0
      %p98 = por %p96, %p97
      %p99 = scmp.ne.s32.totalorder %s88, %s91
      %p100 = scmp.eq.s32.totalorder %s20, 3
      %p101 = por %p99, %p100
      %p102 = scmp.ne.s32.totalorder %s91, %s92
      %p103 = scmp.eq.s32.totalorder %s20, 0
      %p104 = por %p102, %p103
      %p105 = scmp.ne.s32.totalorder %s91, %s92
      %p106 = scmp.eq.s32.totalorder %s21, 3
      %p107 = por %p105, %p106
      %p109 = scmp.ne.s32.totalorder %s92, %s108
      %p110 = scmp.eq.s32.totalorder %s21, 0
      %p111 = por %p109, %p110
      %p112 = scmp.le.s32.totalorder 1, %s15
      %p113 = scmp.lt.s32.totalorder %s15, 5
      %p114 = pnand %p112, %p113
      %p115 = pneg %p114
      // Predicated region
      $region9: #{tpu_custom_call.1} parent=5 // pred_check
        _
      $region10: #{tpu_custom_call.1} parent=5 // pred_check_branch
        %117 = sbr.rel (%p114) target = $region12
      $region11: #{tpu_custom_call.1} parent=5 // pred_region
        %s118 = ssub.s32 %s15, 1
        // Predicated region
        $region13: #{tpu_custom_call.1} parent=11 // pred_check
          %p119 = pneg %p76
        $region14: #{tpu_custom_call.1} parent=11 // pred_check_branch
          %121 = sbr.rel (%p119) target = $region16
        $region15: #{tpu_custom_call.1} parent=11 // pred_region
          %s123 = ssub.s32 4096, 4096
          %124 = vsyncadd [#allocation6], %s123
          %s125 = sshll.u32 [#allocation5], 4
          %s126 = int_to_ptr.vmem [resolvable:$true] %s125
          %131 = dma.hbm_to_vmem [thread:$0]  %s1, 4096, %s126, [#allocation6], 64, 64, 4
        $region16: #{tpu_custom_call.1} parent=11 // pred_fallthru
          _
      $region12: #{tpu_custom_call.1} parent=5 // pred_fallthru
        _
      %p132 = scmp.lt.s32.totalorder %s15, 4
      // Predicated region
      $region17: #{tpu_custom_call.1} parent=5 // pred_check
        %p133 = pneg %p132
      $region18: #{tpu_custom_call.1} parent=5 // pred_check_branch
        %135 = sbr.rel (%p133) target = $region20
      $region19: #{tpu_custom_call.1} parent=5 // pred_region
        // Predicated region
        $region21: #{tpu_custom_call.1} parent=19 // pred_check
          %p136 = pneg %p49
        $region22: #{tpu_custom_call.1} parent=19 // pred_check_branch
          %138 = sbr.rel (%p136) target = $region24
        $region23: #{tpu_custom_call.1} parent=19 // pred_region
          %s139 = sand.u32 %s39, 1
          %s140 = scalar_lea.sflag [#allocation3], %s139
          %s141 = sand.u32 %s39, 1
          %s142 = smul.addr %s141, 128
          %s143 = scalar_lea.vmem [#allocation2], %s142
          %s144 = smul.u32 4, %s23
          %s145 = smul.u32 4, %s22
          %s147 = ssub.s32 2048, 2048
          %148 = vsyncadd %s140, %s147
          %s149 = smul.addr %s144, 8
          %s150 = sadd.s32 %s145, %s149
          %s151 = smul.addr %s150, 128
          %s152 = scalar_lea.hbm %s0, %s151
          %s153 = sshll.u32 %s143, 4
          %s154 = int_to_ptr.vmem [resolvable:$true] %s153
          %159 = dma.hbm_to_vmem [thread:$0]  %s152, 2048, %s154, %s140, 1024, 512, 32
        $region24: #{tpu_custom_call.1} parent=19 // pred_fallthru
          _
      $region20: #{tpu_custom_call.1} parent=5 // pred_fallthru
        _
      %p160 = scmp.le.s32.totalorder 1, %s15
      %p161 = scmp.lt.s32.totalorder %s15, 5
      %p162 = pnand %p160, %p161
      %p163 = pneg %p162
      // Predicated region
      $region25: #{tpu_custom_call.1} parent=5 // pred_check
        _
      $region26: #{tpu_custom_call.1} parent=5 // pred_check_branch
        %165 = sbr.rel (%p162) target = $region28
      $region27: #{tpu_custom_call.1} parent=5 // pred_region
        %s166 = ssub.s32 %s15, 1
        %s167 = sand.u32 %s42, 1
        %s168 = scalar_lea.sflag [#allocation3], %s167
        %s169 = sand.u32 %s42, 1
        %s170 = smul.addr %s169, 128
        %s171 = scalar_lea.vmem [#allocation2], %s170
        // Predicated region
        $region29: #{tpu_custom_call.1} parent=27 // pred_check
          %p172 = pneg %p55
        $region30: #{tpu_custom_call.1} parent=27 // pred_check_branch
          %174 = sbr.rel (%p172) target = $region32
        $region31: #{tpu_custom_call.1} parent=27 // pred_region
          %175 = dma.done %s168, 2048
        $region32: #{tpu_custom_call.1} parent=27 // pred_fallthru
          _
        // Predicated region
        $region33: #{tpu_custom_call.1} parent=27 // pred_check
          %p176 = pneg %p76
        $region34: #{tpu_custom_call.1} parent=27 // pred_check_branch
          %178 = sbr.rel (%p176) target = $region36
        $region35: #{tpu_custom_call.1} parent=27 // pred_region
          %179 = dma.done [#allocation6], 4096
        $region36: #{tpu_custom_call.1} parent=27 // pred_fallthru
          _
        %s180 = sand.u32 %s42, 1
        %s181 = scalar_lea.sflag [#allocation3], %s180
        %s182 = sand.u32 %s42, 1
        %s183 = smul.addr %s182, 128
        %s184 = scalar_lea.vmem [#allocation2], %s183
        %p185 = pneg %p55
        %p186 = pneg %p52
        %p187 = pneg %p76
        %p188 = pneg %p73
        %p189 = pneg %p104
        %p190 = pneg %p101
        %s191 = sand.u32 %s91, 1
        %s192 = scalar_lea.sflag [#allocation4], %s191
        %s193 = sand.u32 %s91, 1
        %s194 = smul.addr %s193, 32
        %s195 = scalar_lea.vmem [#allocation7], %s194
        %s196 = smul.u32 4, %s25
        %s197 = smul.u32 4, %s24
        %s198 = smul.u32 4, %s25
        %v200 = vld [vmem:[%s171] sm:$0xff]
        %v201 = vld [vmem:[%s171 + $0x8] sm:$0xff]
        %v202 = vld [vmem:[%s171 + $0x10] sm:$0xff]
        %v203 = vld [vmem:[%s171 + $0x18] sm:$0xff]
        %v204 = vld [vmem:[%s171 + $0x20] sm:$0xff]
        %v205 = vld [vmem:[%s171 + $0x28] sm:$0xff]
        %v206 = vld [vmem:[%s171 + $0x30] sm:$0xff]
        %v207 = vld [vmem:[%s171 + $0x38] sm:$0xff]
        %v208 = vld [vmem:[%s171 + $0x40] sm:$0xff]
        %v209 = vld [vmem:[%s171 + $0x48] sm:$0xff]
        %v210 = vld [vmem:[%s171 + $0x50] sm:$0xff]
        %v211 = vld [vmem:[%s171 + $0x58] sm:$0xff]
        %v212 = vld [vmem:[%s171 + $0x60] sm:$0xff]
        %v213 = vld [vmem:[%s171 + $0x68] sm:$0xff]
        %v214 = vld [vmem:[%s171 + $0x70] sm:$0xff]
        %v215 = vld [vmem:[%s171 + $0x78] sm:$0xff]
        %v216 = vpack.c.bf16 %v204, %v200
        %v217 = vpack.c.bf16 %v205, %v201
        %v218 = vpack.c.bf16 %v206, %v202
        %v219 = vpack.c.bf16 %v207, %v203
        %v220 = vpack.c.bf16 %v212, %v208
        %v221 = vpack.c.bf16 %v213, %v209
        %v222 = vpack.c.bf16 %v214, %v210
        %v223 = vpack.c.bf16 %v215, %v211
        %v224 = vld [vmem:[#allocation5] sm:$0xf]
        %v225 = vld [vmem:[#allocation5 + $0x4] sm:$0xf]
        %v226 = vld [vmem:[#allocation5 + $0x8] sm:$0xf]
        %v227 = vld [vmem:[#allocation5 + $0xc] sm:$0xf]
        %v228 = vld [vmem:[#allocation5 + $0x10] sm:$0xf]
        %v229 = vld [vmem:[#allocation5 + $0x14] sm:$0xf]
        %v230 = vld [vmem:[#allocation5 + $0x18] sm:$0xf]
        %v231 = vld [vmem:[#allocation5 + $0x1c] sm:$0xf]
        %v232 = vld [vmem:[#allocation5 + $0x20] sm:$0xf]
        %v233 = vld [vmem:[#allocation5 + $0x24] sm:$0xf]
        %v234 = vld [vmem:[#allocation5 + $0x28] sm:$0xf]
        %v235 = vld [vmem:[#allocation5 + $0x2c] sm:$0xf]
        %v236 = vld [vmem:[#allocation5 + $0x30] sm:$0xf]
        %v237 = vld [vmem:[#allocation5 + $0x34] sm:$0xf]
        %v238 = vld [vmem:[#allocation5 + $0x38] sm:$0xf]
        %v239 = vld [vmem:[#allocation5 + $0x3c] sm:$0xf]
        %v240 = vld [vmem:[#allocation5 + $0x40] sm:$0xf]
        %v241 = vld [vmem:[#allocation5 + $0x44] sm:$0xf]
        %v242 = vld [vmem:[#allocation5 + $0x48] sm:$0xf]
        %v243 = vld [vmem:[#allocation5 + $0x4c] sm:$0xf]
        %v244 = vld [vmem:[#allocation5 + $0x50] sm:$0xf]
        %v245 = vld [vmem:[#allocation5 + $0x54] sm:$0xf]
        %v246 = vld [vmem:[#allocation5 + $0x58] sm:$0xf]
        %v247 = vld [vmem:[#allocation5 + $0x5c] sm:$0xf]
        %v248 = vld [vmem:[#allocation5 + $0x60] sm:$0xf]
        %v249 = vld [vmem:[#allocation5 + $0x64] sm:$0xf]
        %v250 = vld [vmem:[#allocation5 + $0x68] sm:$0xf]
        %v251 = vld [vmem:[#allocation5 + $0x6c] sm:$0xf]
        %v252 = vld [vmem:[#allocation5 + $0x70] sm:$0xf]
        %v253 = vld [vmem:[#allocation5 + $0x74] sm:$0xf]
        %v254 = vld [vmem:[#allocation5 + $0x78] sm:$0xf]
        %v255 = vld [vmem:[#allocation5 + $0x7c] sm:$0xf]
        %v256 = vld [vmem:[#allocation5 + $0x80] sm:$0xf]
        %v257 = vld [vmem:[#allocation5 + $0x84] sm:$0xf]
        %v258 = vld [vmem:[#allocation5 + $0x88] sm:$0xf]
        %v259 = vld [vmem:[#allocation5 + $0x8c] sm:$0xf]
        %v260 = vld [vmem:[#allocation5 + $0x90] sm:$0xf]
        %v261 = vld [vmem:[#allocation5 + $0x94] sm:$0xf]
        %v262 = vld [vmem:[#allocation5 + $0x98] sm:$0xf]
        %v263 = vld [vmem:[#allocation5 + $0x9c] sm:$0xf]
        %v264 = vld [vmem:[#allocation5 + $0xa0] sm:$0xf]
        %v265 = vld [vmem:[#allocation5 + $0xa4] sm:$0xf]
        %v266 = vld [vmem:[#allocation5 + $0xa8] sm:$0xf]
        %v267 = vld [vmem:[#allocation5 + $0xac] sm:$0xf]
        %v268 = vld [vmem:[#allocation5 + $0xb0] sm:$0xf]
        %v269 = vld [vmem:[#allocation5 + $0xb4] sm:$0xf]
        %v270 = vld [vmem:[#allocation5 + $0xb8] sm:$0xf]
        %v271 = vld [vmem:[#allocation5 + $0xbc] sm:$0xf]
        %v272 = vld [vmem:[#allocation5 + $0xc0] sm:$0xf]
        %v273 = vld [vmem:[#allocation5 + $0xc4] sm:$0xf]
        %v274 = vld [vmem:[#allocation5 + $0xc8] sm:$0xf]
        %v275 = vld [vmem:[#allocation5 + $0xcc] sm:$0xf]
        %v276 = vld [vmem:[#allocation5 + $0xd0] sm:$0xf]
        %v277 = vld [vmem:[#allocation5 + $0xd4] sm:$0xf]
        %v278 = vld [vmem:[#allocation5 + $0xd8] sm:$0xf]
        %v279 = vld [vmem:[#allocation5 + $0xdc] sm:$0xf]
        %v280 = vld [vmem:[#allocation5 + $0xe0] sm:$0xf]
        %v281 = vld [vmem:[#allocation5 + $0xe4] sm:$0xf]
        %v282 = vld [vmem:[#allocation5 + $0xe8] sm:$0xf]
        %v283 = vld [vmem:[#allocation5 + $0xec] sm:$0xf]
        %v284 = vld [vmem:[#allocation5 + $0xf0] sm:$0xf]
        %v285 = vld [vmem:[#allocation5 + $0xf4] sm:$0xf]
        %v286 = vld [vmem:[#allocation5 + $0xf8] sm:$0xf]
        %v287 = vld [vmem:[#allocation5 + $0xfc] sm:$0xf]
        %v352 = vunpack.c.l.b16 %v224
        %v353 = vunpack.c.l.b16 %v225
        %v354 = vunpack.c.l.b16 %v226
        %v355 = vunpack.c.l.b16 %v227
        %v356 = vunpack.c.l.b16 %v228
        %v357 = vunpack.c.l.b16 %v229
        %v358 = vunpack.c.l.b16 %v230
        %v359 = vunpack.c.l.b16 %v231
        %v360 = vunpack.c.l.b16 %v232
        %v361 = vunpack.c.l.b16 %v233
        %v362 = vunpack.c.l.b16 %v234
        %v363 = vunpack.c.l.b16 %v235
        %v364 = vunpack.c.l.b16 %v236
        %v365 = vunpack.c.l.b16 %v237
        %v366 = vunpack.c.l.b16 %v238
        %v367 = vunpack.c.l.b16 %v239
        %v368 = vunpack.c.l.b16 %v240
        %v369 = vunpack.c.l.b16 %v241
        %v370 = vunpack.c.l.b16 %v242
        %v371 = vunpack.c.l.b16 %v243
        %v372 = vunpack.c.l.b16 %v244
        %v373 = vunpack.c.l.b16 %v245
        %v374 = vunpack.c.l.b16 %v246
        %v375 = vunpack.c.l.b16 %v247
        %v376 = vunpack.c.l.b16 %v248
        %v377 = vunpack.c.l.b16 %v249
        %v378 = vunpack.c.l.b16 %v250
        %v379 = vunpack.c.l.b16 %v251
        %v380 = vunpack.c.l.b16 %v252
        %v381 = vunpack.c.l.b16 %v253
        %v382 = vunpack.c.l.b16 %v254
        %v383 = vunpack.c.l.b16 %v255
        %v384 = vunpack.c.l.b16 %v256
        %v385 = vunpack.c.l.b16 %v257
        %v386 = vunpack.c.l.b16 %v258
        %v387 = vunpack.c.l.b16 %v259
        %v388 = vunpack.c.l.b16 %v260
        %v389 = vunpack.c.l.b16 %v261
        %v390 = vunpack.c.l.b16 %v262
        %v391 = vunpack.c.l.b16 %v263
        %v392 = vunpack.c.l.b16 %v264
        %v393 = vunpack.c.l.b16 %v265
        %v394 = vunpack.c.l.b16 %v266
        %v395 = vunpack.c.l.b16 %v267
        %v396 = vunpack.c.l.b16 %v268
        %v397 = vunpack.c.l.b16 %v269
        %v398 = vunpack.c.l.b16 %v270
        %v399 = vunpack.c.l.b16 %v271
        %v400 = vunpack.c.l.b16 %v272
        %v401 = vunpack.c.l.b16 %v273
        %v402 = vunpack.c.l.b16 %v274
        %v403 = vunpack.c.l.b16 %v275
        %v404 = vunpack.c.l.b16 %v276
        %v405 = vunpack.c.l.b16 %v277
        %v406 = vunpack.c.l.b16 %v278
        %v407 = vunpack.c.l.b16 %v279
        %v408 = vunpack.c.l.b16 %v280
        %v409 = vunpack.c.l.b16 %v281
        %v410 = vunpack.c.l.b16 %v282
        %v411 = vunpack.c.l.b16 %v283
        %v412 = vunpack.c.l.b16 %v284
        %v413 = vunpack.c.l.b16 %v285
        %v414 = vunpack.c.l.b16 %v286
        %v415 = vunpack.c.l.b16 %v287
        %v416 = vpack.c.b16 %v353, %v352
        %v417 = vpack.c.b16 %v355, %v354
        %v418 = vpack.c.b16 %v357, %v356
        %v419 = vpack.c.b16 %v359, %v358
        %v420 = vpack.c.b16 %v361, %v360
        %v421 = vpack.c.b16 %v363, %v362
        %v422 = vpack.c.b16 %v365, %v364
        %v423 = vpack.c.b16 %v367, %v366
        %v424 = vpack.c.b16 %v369, %v368
        %v425 = vpack.c.b16 %v371, %v370
        %v426 = vpack.c.b16 %v373, %v372
        %v427 = vpack.c.b16 %v375, %v374
        %v428 = vpack.c.b16 %v377, %v376
        %v429 = vpack.c.b16 %v379, %v378
        %v430 = vpack.c.b16 %v381, %v380
        %v431 = vpack.c.b16 %v383, %v382
        %v432 = vpack.c.b16 %v385, %v384
        %v433 = vpack.c.b16 %v387, %v386
        %v434 = vpack.c.b16 %v389, %v388
        %v435 = vpack.c.b16 %v391, %v390
        %v436 = vpack.c.b16 %v393, %v392
        %v437 = vpack.c.b16 %v395, %v394
        %v438 = vpack.c.b16 %v397, %v396
        %v439 = vpack.c.b16 %v399, %v398
        %v440 = vpack.c.b16 %v401, %v400
        %v441 = vpack.c.b16 %v403, %v402
        %v442 = vpack.c.b16 %v405, %v404
        %v443 = vpack.c.b16 %v407, %v406
        %v444 = vpack.c.b16 %v409, %v408
        %v445 = vpack.c.b16 %v411, %v410
        %v446 = vpack.c.b16 %v413, %v412
        %v447 = vpack.c.b16 %v415, %v414
        %480 = vmatprep.subr.bf16.mxu0 0
        %481 = vmatpush1.bf16.msra.mxu0 %v416
        %482 = vmatprep.subr.bf16.mxu0 0
        %483 = vmatpush1.bf16.msra.mxu0 %v417
        %484 = vmatprep.subr.bf16.mxu0 0
        %485 = vmatpush1.bf16.msra.mxu0 %v418
        %486 = vmatprep.subr.bf16.mxu0 0
        %487 = vmatpush1.bf16.msra.mxu0 %v419
        %488 = vmatprep.subr.bf16.mxu0 0
        %489 = vmatpush1.bf16.msra.mxu0 %v420
        %490 = vmatprep.subr.bf16.mxu0 0
        %491 = vmatpush1.bf16.msra.mxu0 %v421
        %492 = vmatprep.subr.bf16.mxu0 0
        %493 = vmatpush1.bf16.msra.mxu0 %v422
        %494 = vmatprep.subr.bf16.mxu0 0
        %495 = vmatpush1.bf16.msra.mxu0 %v423
        %496 = vmatprep.subr.bf16.mxu0 0
        %497 = vmatpush1.bf16.msra.mxu0 %v424
        %498 = vmatprep.subr.bf16.mxu0 0
        %499 = vmatpush1.bf16.msra.mxu0 %v425
        %500 = vmatprep.subr.bf16.mxu0 0
        %501 = vmatpush1.bf16.msra.mxu0 %v426
        %502 = vmatprep.subr.bf16.mxu0 0
        %503 = vmatpush1.bf16.msra.mxu0 %v427
        %504 = vmatprep.subr.bf16.mxu0 0
        %505 = vmatpush1.bf16.msra.mxu0 %v428
        %506 = vmatprep.subr.bf16.mxu0 0
        %507 = vmatpush1.bf16.msra.mxu0 %v429
        %508 = vmatprep.subr.bf16.mxu0 0
        %509 = vmatpush1.bf16.msra.mxu0 %v430
        %510 = vmatprep.subr.bf16.mxu0 0
        %511 = vmatpush1.bf16.msra.mxu0 %v431
        %512 = vmatprep.mubr.bf16.mxu0 %v217
        %513 = vmatmul.mubr.bf16.gmra.mrb[0].mxu0 %v216
        %v514 = vpop.f32.mrb[0].mxu0
        %v515 = vadd.f32 0.03125, %v514
        %v516 = vpop.f32.mrb[0].mxu0
        %v517 = vpop.f32.mrb[0].mxu0
        %v518 = vadd.f32 0.03125, %v517
        %v519 = vpop.f32.mrb[0].mxu0
        %520 = vmatprep.mubr.bf16.mxu0 %v221
        %521 = vmatmul.mubr.bf16.gmra.mrb[0].mxu0 %v220
        %v522 = vpop.f32.mrb[0].mxu0
        %v523 = vadd.f32 0.03125, %v522
        %v524 = vpop.f32.mrb[0].mxu0
        %v525 = vpop.f32.mrb[0].mxu0
        %v526 = vadd.f32 0.03125, %v525
        %v527 = vpop.f32.mrb[0].mxu0
        %528 = vdwg.mxu0
        %529 = vmatprep.subr.bf16.mxu0 0
        %530 = vmatpush1.bf16.msra.mxu0 %v432
        %531 = vmatprep.subr.bf16.mxu0 0
        %532 = vmatpush1.bf16.msra.mxu0 %v433
        %533 = vmatprep.subr.bf16.mxu0 0
        %534 = vmatpush1.bf16.msra.mxu0 %v434
        %535 = vmatprep.subr.bf16.mxu0 0
        %536 = vmatpush1.bf16.msra.mxu0 %v435
        %537 = vmatprep.subr.bf16.mxu0 0
        %538 = vmatpush1.bf16.msra.mxu0 %v436
        %539 = vmatprep.subr.bf16.mxu0 0
        %540 = vmatpush1.bf16.msra.mxu0 %v437
        %541 = vmatprep.subr.bf16.mxu0 0
        %542 = vmatpush1.bf16.msra.mxu0 %v438
        %543 = vmatprep.subr.bf16.mxu0 0
        %544 = vmatpush1.bf16.msra.mxu0 %v439
        %545 = vmatprep.subr.bf16.mxu0 0
        %546 = vmatpush1.bf16.msra.mxu0 %v440
        %547 = vmatprep.subr.bf16.mxu0 0
        %548 = vmatpush1.bf16.msra.mxu0 %v441
        %549 = vmatprep.subr.bf16.mxu0 0
        %550 = vmatpush1.bf16.msra.mxu0 %v442
        %551 = vmatprep.subr.bf16.mxu0 0
        %552 = vmatpush1.bf16.msra.mxu0 %v443
        %553 = vmatprep.subr.bf16.mxu0 0
        %554 = vmatpush1.bf16.msra.mxu0 %v444
        %555 = vmatprep.subr.bf16.mxu0 0
        %556 = vmatpush1.bf16.msra.mxu0 %v445
        %557 = vmatprep.subr.bf16.mxu0 0
        %558 = vmatpush1.bf16.msra.mxu0 %v446
        %559 = vmatprep.subr.bf16.mxu0 0
        %560 = vmatpush1.bf16.msra.mxu0 %v447
        %561 = vmatprep.mubr.bf16.mxu0 %v219
        %562 = vmatmul.mubr.bf16.gmra.mrb[0].mxu0 %v218
        %v563 = vpop.f32.mrb[0].mxu0
        %v564 = vadd.f32 %v515, %v563
        %v565 = vpop.f32.mrb[0].mxu0
        %v566 = vpop.f32.mrb[0].mxu0
        %v567 = vadd.f32 %v518, %v566
        %v568 = vpop.f32.mrb[0].mxu0
        %569 = vmatprep.mubr.bf16.mxu0 %v223
        %570 = vmatmul.mubr.bf16.gmra.mrb[0].mxu0 %v222
        %v571 = vpop.f32.mrb[0].mxu0
        %v572 = vadd.f32 %v523, %v571
        %v573 = vpop.f32.mrb[0].mxu0
        %v574 = vpop.f32.mrb[0].mxu0
        %v575 = vadd.f32 %v526, %v574
        %v576 = vpop.f32.mrb[0].mxu0
        %577 = vdwg.mxu0
        %578 = vst [vmem:[%s195] sm:$0xff] %v564
        %579 = vst [vmem:[%s195 + $0x8] sm:$0xff] %v567
        %580 = vst [vmem:[%s195 + $0x10] sm:$0xff] %v572
        %581 = vst [vmem:[%s195 + $0x18] sm:$0xff] %v575
        %s582 = sand.u32 %s91, 1
        %s583 = scalar_lea.sflag [#allocation4], %s582
        %s584 = sand.u32 %s91, 1
        %s585 = smul.addr %s584, 32
        %s586 = scalar_lea.vmem [#allocation7], %s585
        // Predicated region
        $region37: #{tpu_custom_call.1} parent=27 // pred_check
          %p587 = pneg %p101
        $region38: #{tpu_custom_call.1} parent=27 // pred_check_branch
          %589 = sbr.rel (%p587) target = $region40
        $region39: #{tpu_custom_call.1} parent=27 // pred_region
          %s590 = smul.u32 4, %s25
          %s592 = ssub.s32 512, 512
          %593 = vsyncadd %s583, %s592
          %s594 = smul.addr %s590, 2
          %s595 = sadd.s32 %s24, %s594
          %s596 = smul.addr %s595, 128
          %s597 = scalar_lea.hbm %s2, %s596
          %s598 = sshll.u32 %s586, 4
          %s599 = int_to_ptr.vmem [resolvable:$true] %s598
          %604 = dma.vmem_to_hbm [thread:$0]  %s599, 512, %s597, %s583, 128, 256, 8
        $region40: #{tpu_custom_call.1} parent=27 // pred_fallthru
          _
      $region28: #{tpu_custom_call.1} parent=5 // pred_fallthru
        _
      %p605 = scmp.le.s32.totalorder 2, %s15
      // Predicated region
      $region41: #{tpu_custom_call.1} parent=5 // pred_check
        %p606 = pneg %p605
      $region42: #{tpu_custom_call.1} parent=5 // pred_check_branch
        %608 = sbr.rel (%p606) target = $region44
      $region43: #{tpu_custom_call.1} parent=5 // pred_region
        %s609 = ssub.s32 %s15, 2
        // Predicated region
        $region45: #{tpu_custom_call.1} parent=43 // pred_check
          %p610 = pneg %p107
        $region46: #{tpu_custom_call.1} parent=43 // pred_check_branch
          %612 = sbr.rel (%p610) target = $region48
        $region47: #{tpu_custom_call.1} parent=43 // pred_region
          %s613 = sand.u32 %s92, 1
          %s614 = scalar_lea.sflag [#allocation4], %s613
          %s615 = sand.u32 %s92, 1
          %s616 = smul.addr %s615, 32
          %s617 = scalar_lea.vmem [#allocation7], %s616
          %618 = dma.done %s614, 512
        $region48: #{tpu_custom_call.1} parent=43 // pred_fallthru
          _
      $region44: #{tpu_custom_call.1} parent=5 // pred_fallthru
        _
    $region6: #{tpu_custom_call.1} parent=1 // loop_footer
      %s19 = sadd.s32 1, %s15
    $region7: #{tpu_custom_call.1} parent=1 // loop_footer_branch
      %14 = sbr.rel target = $region3
    $region8: #{tpu_custom_call.1} parent=1 // loop_exit
      _
    %619 = vsyncpa [#allocation3], 1
    %s620 = scalar_lea.sflag [#allocation3], 1
    %621 = vsyncpa %s620, 1
    %622 = vsyncpa [#allocation6], 1
    %623 = vsyncpa [#allocation4], 1
    %s624 = scalar_lea.sflag [#allocation4], 1
    %625 = vsyncpa %s624, 1

</llo_original>
